<compile_context>
chip_gen: v7x
topology: tpu7x:2x2x1
jax: 0.10.0
libtpu: 0.0.40
codegen_flags: <defaults>
</compile_context>

<pallas_src>
import functools
import math

import jax
import jax.numpy as jnp
from jax.experimental import pallas as pl
from jax.experimental.pallas import tpu as pltpu

# <= v7x's 64 MiB physical VMEM per TensorCore; ample headroom on v5e/v6e (128 MiB).
VMEM_LIMIT = 48 * 1024 * 1024


# ----------------------------- helpers -----------------------------

def _round_up(x, m):
    return (x + m - 1) // m * m


def _row_tile(M, tm_max=512):
    """Row-tile size and padded row count. Keeps >=2 tiles when there is enough
    work so both v7x TensorCores (megacore 'parallel' axis) get a share."""
    tm = min(tm_max, _round_up(M, 8))
    Mp = _round_up(M, tm)
    if Mp // tm == 1 and Mp >= 16:
        tm = _round_up(Mp // 2, 8)
        Mp = _round_up(M, tm)
    return tm, Mp


def _pad_rows(x, Mp):
    M = x.shape[0]
    return x if M == Mp else jnp.pad(x, ((0, Mp - M), (0, 0)))


def _as_bf16(a):
    return a if a.dtype == jnp.bfloat16 else a.astype(jnp.bfloat16)


def _gelu(y):
    # TODO(synk): reference BERT uses exact erf-based GELU; tanh approximation
    # ("gelu_new") is used because tanh is guaranteed on the TPU EUP.
    return 0.5 * y * (1.0 + jnp.tanh(0.7978845608028654 * (y + 0.044715 * y * y * y)))


# --------------------- matmul (resident weight, fused epilogue) ---------------------

def _linear_kernel(x_ref, w_ref, b_ref, o_ref, *, activation):
    y = jnp.dot(x_ref[...], w_ref[...], preferred_element_type=jnp.float32)
    y = y + b_ref[...]
    if activation == "gelu":
        y = _gelu(y)
    elif activation == "tanh":
        y = jnp.tanh(y)
    o_ref[...] = y.astype(o_ref.dtype)


def pallas_linear(x, w, b, *, activation=None, out_dtype=jnp.bfloat16, tm_max=512):
    """y = act(x @ w + b). Full (K, N) weight stays resident in VMEM; grid over
    rows only, so stores are lane-dense over the full N."""
    M, K = x.shape
    N = w.shape[1]
    tm, Mp = _row_tile(M, tm_max)
    xp = _pad_rows(_as_bf16(x), Mp)
    wp = _as_bf16(w)                      # weights are pre-cast at init; no-op then
    b2 = b.reshape(1, N).astype(jnp.float32)

    out = pl.pallas_call(
        functools.partial(_linear_kernel, activation=activation),
        out_shape=jax.ShapeDtypeStruct((Mp, N), out_dtype),
        grid=(Mp // tm,),
        in_specs=[
            pl.BlockSpec((tm, K), lambda i: (i, 0)),
            pl.BlockSpec((K, N), lambda i: (0, 0)),      # resident weight
            pl.BlockSpec((1, N), lambda i: (0, 0)),
        ],
        out_specs=pl.BlockSpec((tm, N), lambda i: (i, 0)),
        compiler_params=pltpu.CompilerParams(
            dimension_semantics=("parallel",),
            vmem_limit_bytes=VMEM_LIMIT),
        cost_estimate=pl.CostEstimate(
            flops=2 * Mp * N * K,
            transcendentals=(Mp * N if activation else 0),
            bytes_accessed=2 * (Mp * K + K * N)
                           + Mp * N * jnp.dtype(out_dtype).itemsize),
    )(xp, wp, b2)
    return out[:M] if Mp != M else out


# ------------------- matmul with fused residual + LayerNorm -------------------

def _linear_add_ln_kernel(x_ref, w_ref, b_ref, r_ref, g_ref, be_ref, o_ref, *, eps):
    y = jnp.dot(x_ref[...], w_ref[...], preferred_element_type=jnp.float32)
    y = y + b_ref[...] + r_ref[...].astype(jnp.float32)
    mu = jnp.mean(y, axis=-1, keepdims=True)
    var = jnp.mean(jnp.square(y - mu), axis=-1, keepdims=True)
    inv = jax.lax.rsqrt(var + eps)
    o_ref[...] = ((y - mu) * inv * g_ref[...] + be_ref[...]).astype(o_ref.dtype)


def pallas_linear_add_ln(x, w, b, *, residual, gamma, beta, eps=1e-12,
                         out_dtype=jnp.bfloat16, tm_max=512):
    """LayerNorm((x @ w + b) + residual). N (= hidden) is whole in the block
    because LayerNorm reduces over it; weight is VMEM-resident; grid over rows."""
    M, K = x.shape
    N = w.shape[1]
    tm, Mp = _row_tile(M, tm_max)
    xp = _pad_rows(_as_bf16(x), Mp)
    rp = _pad_rows(_as_bf16(residual), Mp)
    wp = _as_bf16(w)
    b2 = b.reshape(1, N).astype(jnp.float32)
    g2 = gamma.reshape(1, N).astype(jnp.float32)
    be2 = beta.reshape(1, N).astype(jnp.float32)

    out = pl.pallas_call(
        functools.partial(_linear_add_ln_kernel, eps=eps),
        out_shape=jax.ShapeDtypeStruct((Mp, N), out_dtype),
        grid=(Mp // tm,),
        in_specs=[
            pl.BlockSpec((tm, K), lambda i: (i, 0)),
            pl.BlockSpec((K, N), lambda i: (0, 0)),      # resident weight
            pl.BlockSpec((1, N), lambda i: (0, 0)),
            pl.BlockSpec((tm, N), lambda i: (i, 0)),     # residual (bf16)
            pl.BlockSpec((1, N), lambda i: (0, 0)),
            pl.BlockSpec((1, N), lambda i: (0, 0)),
        ],
        out_specs=pl.BlockSpec((tm, N), lambda i: (i, 0)),
        compiler_params=pltpu.CompilerParams(
            dimension_semantics=("parallel",),
            vmem_limit_bytes=VMEM_LIMIT),
        cost_estimate=pl.CostEstimate(
            flops=2 * Mp * N * K,
            transcendentals=Mp,
            bytes_accessed=2 * (Mp * K + K * N + 2 * Mp * N)),
    )(xp, wp, b2, rp, g2, be2)
    return out[:M] if Mp != M else out


# ----------------------------- standalone LayerNorm -----------------------------

def _ln_kernel(x_ref, g_ref, b_ref, o_ref, *, eps):
    x = x_ref[...].astype(jnp.float32)
    mu = jnp.mean(x, axis=-1, keepdims=True)
    var = jnp.mean(jnp.square(x - mu), axis=-1, keepdims=True)
    inv = jax.lax.rsqrt(var + eps)
    o_ref[...] = ((x - mu) * inv * g_ref[...] + b_ref[...]).astype(o_ref.dtype)


def pallas_layernorm(x, gamma, beta, *, eps=1e-12, out_dtype=jnp.bfloat16, tm_max=512):
    M, H = x.shape
    tm, Mp = _row_tile(M, tm_max)
    xp = _pad_rows(x, Mp)
    out = pl.pallas_call(
        functools.partial(_ln_kernel, eps=eps),
        out_shape=jax.ShapeDtypeStruct((Mp, H), out_dtype),
        grid=(Mp // tm,),
        in_specs=[
            pl.BlockSpec((tm, H), lambda i: (i, 0)),
            pl.BlockSpec((1, H), lambda i: (0, 0)),
            pl.BlockSpec((1, H), lambda i: (0, 0)),
        ],
        out_specs=pl.BlockSpec((tm, H), lambda i: (i, 0)),
        compiler_params=pltpu.CompilerParams(
            dimension_semantics=("parallel",),
            vmem_limit_bytes=VMEM_LIMIT),
    )(xp, gamma.reshape(1, H).astype(jnp.float32),
      beta.reshape(1, H).astype(jnp.float32))
    return out[:M] if Mp != M else out


# ----------------------------- attention -----------------------------

def _attention_kernel(qkv_ref, m_ref, o_ref, *, num_heads, head_dim, scale):
    H = num_heads * head_dim
    qkv = qkv_ref[...]                         # [S, 3H] bf16, resident per batch
    mask = m_ref[...][0, 0:1, :]               # [1, S] additive mask (0 / -10000)
    ctx_cols = []
    for h in range(num_heads):                 # static unroll; one head's [S,S] live at a time
        q = qkv[:, h * head_dim:(h + 1) * head_dim]
        k = qkv[:, H + h * head_dim:H + (h + 1) * head_dim]
        v = qkv[:, 2 * H + h * head_dim:2 * H + (h + 1) * head_dim]
        s = jax.lax.dot_general(q, k, (((1,), (1,)), ((), ())),
                                preferred_element_type=jnp.float32) * scale
        s = s + mask
        s = s - jnp.max(s, axis=-1, keepdims=True)
        p = jnp.exp(s)
        denom = jnp.sum(p, axis=-1, keepdims=True)
        ctx = jnp.dot(p.astype(v.dtype), v, preferred_element_type=jnp.float32)
        # deferred softmax normalisation: [S, Dh] multiply instead of [S, S]
        ctx_cols.append(ctx * pl.reciprocal(denom, approx=True))
    o_ref[...] = jnp.concatenate(ctx_cols, axis=-1).astype(o_ref.dtype)


def pallas_attention(qkv, mask_add, *, batch, seq, num_heads, head_dim, scale):
    """qkv: [B*S, 3H] bf16 slab (columns [Q | K | V]); mask_add: [B, 8, S] f32.
    Returns ctx as a [B*S, H] bf16 slab (lane-dense stores over H).
    Assumes seq % 8 == 0 (standard for BERT inputs)."""
    M, threeH = qkv.shape
    H = num_heads * head_dim
    return pl.pallas_call(
        functools.partial(_attention_kernel, num_heads=num_heads,
                          head_dim=head_dim, scale=scale),
        out_shape=jax.ShapeDtypeStruct((M, H), jnp.bfloat16),
        grid=(batch,),
        in_specs=[
            pl.BlockSpec((seq, threeH), lambda b: (b, 0)),
            pl.BlockSpec((1, 8, seq), lambda b: (b, 0, 0)),
        ],
        out_specs=pl.BlockSpec((seq, H), lambda b: (b, 0)),
        compiler_params=pltpu.CompilerParams(
            dimension_semantics=("parallel",),
            vmem_limit_bytes=VMEM_LIMIT),
    )(qkv, mask_add)


# ----------------------------- parameters -----------------------------

def init_params(key, cfg):
    H = cfg["hidden_size"]
    I = cfg["intermediate_size"]
    L = cfg["num_hidden_layers"]

    def dense(k, fan_in, fan_out):
        # weights stored bf16 once (no per-forward casts); biases stay f32
        w = (jax.random.normal(k, (fan_in, fan_out), jnp.float32) * 0.02)
        return {"w": w.astype(jnp.bfloat16), "b": jnp.zeros((fan_out,), jnp.float32)}

    keys = jax.random.split(key, 5 + 4 * L)
    params = {
        "word_emb": jax.random.normal(keys[0], (cfg["vocab_size"], H), jnp.float32) * 0.02,
        "pos_emb": jax.random.normal(keys[1], (cfg["max_position_embeddings"], H), jnp.float32) * 0.02,
        "type_emb": jax.random.normal(keys[2], (cfg["type_vocab_size"], H), jnp.float32) * 0.02,
        "emb_ln_g": jnp.ones((H,), jnp.float32),
        "emb_ln_b": jnp.zeros((H,), jnp.float32),
        "pooler": dense(keys[3], H, H),
        "classifier": dense(keys[4], H, cfg["num_labels"]),
        "layers": [],
    }
    for l in range(L):
        k0 = 5 + 4 * l
        # Q, K, V fused into a single [H, 3H] matmul.  Columns are ordered
        # [Q | K | V], each internally laid out (nH, Dh); real checkpoints must
        # be packed the same way.
        params["layers"].append({
            "qkv": dense(keys[k0 + 0], H, 3 * H),
            "attn_out": dense(keys[k0 + 1], H, H),
            "ln1_g": jnp.ones((H,), jnp.float32),
            "ln1_b": jnp.zeros((H,), jnp.float32),
            "inter": dense(keys[k0 + 2], H, I),
            "out": dense(keys[k0 + 3], I, H),
            "ln2_g": jnp.ones((H,), jnp.float32),
            "ln2_b": jnp.zeros((H,), jnp.float32),
        })
    return params


# ----------------------------- BERT forward -----------------------------

def bert_forward(params, input_ids, attention_mask, cfg):
    B, S = input_ids.shape
    H = cfg["hidden_size"]
    nH = cfg["num_attention_heads"]
    Dh = H // nH
    scale = 1.0 / math.sqrt(Dh)
    M = B * S

    # --- embeddings (gathers/adds are XLA glue; LayerNorm is a Pallas kernel) ---
    pos_ids = jnp.arange(S)
    tok_type = jnp.zeros((B, S), jnp.int32)
    emb = (jnp.take(params["word_emb"], input_ids, axis=0)
           + params["pos_emb"][pos_ids][None, :, :]
           + jnp.take(params["type_emb"], tok_type, axis=0))
    x = pallas_layernorm(emb.reshape(M, H), params["emb_ln_g"], params["emb_ln_b"])
    # (embedding dropout is identity at inference)

    # --- extended attention mask: (1 - mask) * -10000, sublane-padded to [B, 8, S] ---
    if attention_mask is None:
        attention_mask = jnp.ones((B, S), jnp.float32)
    ext = (1.0 - attention_mask.astype(jnp.float32)) * -10000.0      # [B, S]
    mask_add = jnp.broadcast_to(ext[:, None, :], (B, 8, S))          # [B, 8, S]

    # --- encoder layers (activations stay as a bf16 [M, H] slab) ---
    for layer in params["layers"]:
        qkv = pallas_linear(x, layer["qkv"]["w"], layer["qkv"]["b"])          # [M, 3H]
        ctx = pallas_attention(qkv, mask_add, batch=B, seq=S,
                               num_heads=nH, head_dim=Dh, scale=scale)        # [M, H]
        x = pallas_linear_add_ln(ctx, layer["attn_out"]["w"], layer["attn_out"]["b"],
                                 residual=x, gamma=layer["ln1_g"], beta=layer["ln1_b"])
        inter = pallas_linear(x, layer["inter"]["w"], layer["inter"]["b"],
                              activation="gelu")                               # [M, I]
        x = pallas_linear_add_ln(inter, layer["out"]["w"], layer["out"]["b"],
                                 residual=x, gamma=layer["ln2_g"], beta=layer["ln2_b"])

    # --- pooler: tanh(W @ hidden[:, 0] + b); classifier (dropout = identity) ---
    cls = x.reshape(B, S, H)[:, 0, :]                                          # [B, H]
    pooled = pallas_linear(cls, params["pooler"]["w"], params["pooler"]["b"],
                           activation="tanh")
    logits = pallas_linear(pooled, params["classifier"]["w"],
                           params["classifier"]["b"], out_dtype=jnp.float32)
    return logits                                                              # [B, num_labels]


# ----------------------------- main -----------------------------

if __name__ == "__main__":
    cfg = dict(
        vocab_size=128,
        hidden_size=32,
        num_hidden_layers=2,
        num_attention_heads=4,
        intermediate_size=64,
        max_position_embeddings=16,
        type_vocab_size=2,
        num_labels=3,
        hidden_dropout_prob=0.1,   # identity at eval
    )
    B, S = 2, 8

    key = jax.random.PRNGKey(0)
    k_ids, k_params = jax.random.split(key)
    input_ids = jax.random.randint(k_ids, (B, S), 0, cfg["vocab_size"], dtype=jnp.int32)
    attention_mask = jnp.array(
        [[1, 1, 1, 1, 1, 1, 1, 1],
         [1, 1, 1, 1, 1, 1, 0, 0]], dtype=jnp.float32)

    params = init_params(k_params, cfg)
    logits = bert_forward(params, input_ids, attention_mask, cfg)
    logits = jax.block_until_ready(logits)

    assert logits.shape == (B, cfg["num_labels"]), logits.shape
    assert bool(jnp.all(jnp.isfinite(logits)))
    print("KERNEL_OK")
</pallas_src>

<mosaic_0001>
module attributes {stable_mosaic.version = 11 : i64} {
  func.func @_ln_kernel(%arg0: i32, %arg1: memref<8x32xf32, #tpu.memory_space<vmem>>, %arg2: memref<1x32xf32, #tpu.memory_space<vmem>>, %arg3: memref<1x32xf32, #tpu.memory_space<vmem>>, %arg4: memref<8x32xbf16, #tpu.memory_space<vmem>>) attributes {dimension_semantics = [#tpu.dimension_semantics<parallel>], iteration_bounds = array<i64: 2>, scalar_prefetch = 0 : i64, scratch_operands = 0 : i64, tpu.core_type = #tpu.core_type<tc>, window_params = [{transform_indices = @transform_0, window_bounds = array<i64: 8, 32>}, {pipeline_mode = #tpu.pipeline_mode<synchronous>, transform_indices = @transform_1, window_bounds = array<i64: 1, 32>}, {pipeline_mode = #tpu.pipeline_mode<synchronous>, transform_indices = @transform_2, window_bounds = array<i64: 1, 32>}, {transform_indices = @transform_3, window_bounds = array<i64: 8, 32>}]} {
    %c0 = arith.constant 0 : index
    %c0_0 = arith.constant 0 : index
    %0 = vector.load %arg1[%c0, %c0_0] : memref<8x32xf32, #tpu.memory_space<vmem>>, vector<8x32xf32>
    %cst = arith.constant dense<0.000000e+00> : vector<8xf32>
    %1 = vector.multi_reduction <add>, %0, %cst [1] : vector<8x32xf32> to vector<8xf32>
    %2 = vector.shape_cast %1 : vector<8xf32> to vector<8x1xf32>
    %cst_1 = arith.constant 3.200000e+01 : f32
    %3 = vector.broadcast %cst_1 : f32 to vector<8x1xf32>
    %4 = arith.divf %2, %3 : vector<8x1xf32>
    %5 = vector.broadcast %4 : vector<8x1xf32> to vector<8x32xf32>
    %6 = arith.subf %0, %5 : vector<8x32xf32>
    %7 = arith.mulf %6, %6 : vector<8x32xf32>
    %cst_2 = arith.constant dense<0.000000e+00> : vector<8xf32>
    %8 = vector.multi_reduction <add>, %7, %cst_2 [1] : vector<8x32xf32> to vector<8xf32>
    %9 = vector.shape_cast %8 : vector<8xf32> to vector<8x1xf32>
    %cst_3 = arith.constant 3.200000e+01 : f32
    %10 = vector.broadcast %cst_3 : f32 to vector<8x1xf32>
    %11 = arith.divf %9, %10 : vector<8x1xf32>
    %cst_4 = arith.constant 9.99999996E-13 : f32
    %12 = vector.broadcast %cst_4 : f32 to vector<8x1xf32>
    %13 = arith.addf %11, %12 : vector<8x1xf32>
    %14 = math.rsqrt %13 : vector<8x1xf32>
    %15 = vector.broadcast %4 : vector<8x1xf32> to vector<8x32xf32>
    %16 = arith.subf %0, %15 : vector<8x32xf32>
    %17 = vector.broadcast %14 : vector<8x1xf32> to vector<8x32xf32>
    %18 = arith.mulf %16, %17 : vector<8x32xf32>
    %c0_5 = arith.constant 0 : index
    %c0_6 = arith.constant 0 : index
    %19 = vector.load %arg2[%c0_5, %c0_6] : memref<1x32xf32, #tpu.memory_space<vmem>>, vector<1x32xf32>
    %20 = vector.broadcast %19 : vector<1x32xf32> to vector<8x32xf32>
    %21 = arith.mulf %18, %20 : vector<8x32xf32>
    %c0_7 = arith.constant 0 : index
    %c0_8 = arith.constant 0 : index
    %22 = vector.load %arg3[%c0_7, %c0_8] : memref<1x32xf32, #tpu.memory_space<vmem>>, vector<1x32xf32>
    %23 = vector.broadcast %22 : vector<1x32xf32> to vector<8x32xf32>
    %24 = arith.addf %21, %23 : vector<8x32xf32>
    %25 = arith.truncf %24 : vector<8x32xf32> to vector<8x32xbf16>
    %c0_9 = arith.constant 0 : index
    %c0_10 = arith.constant 0 : index
    %26 = vector.load %arg4[%c0_9, %c0_10] : memref<8x32xbf16, #tpu.memory_space<vmem>>, vector<8x32xbf16>
    tpu.vector_store %arg4[%c0_9, %c0_10], %25 {strides = array<i32>} : memref<8x32xbf16, #tpu.memory_space<vmem>>, vector<8x32xbf16>,
    return
  }
  func.func @transform_0(%arg0: i32) -> (i32, i32) {
    %c0_i32 = arith.constant 0 : i32
    %c0_i32_0 = arith.constant 0 : i32
    return %arg0, %c0_i32 : i32, i32
  }
  func.func @transform_1(%arg0: i32) -> (i32, i32) {
    %c0_i32 = arith.constant 0 : i32
    %c0_i32_0 = arith.constant 0 : i32
    %c0_i32_1 = arith.constant 0 : i32
    return %c0_i32, %c0_i32_0 : i32, i32
  }
  func.func @transform_2(%arg0: i32) -> (i32, i32) {
    %c0_i32 = arith.constant 0 : i32
    %c0_i32_0 = arith.constant 0 : i32
    %c0_i32_1 = arith.constant 0 : i32
    return %c0_i32, %c0_i32_0 : i32, i32
  }
  func.func @transform_3(%arg0: i32) -> (i32, i32) {
    %c0_i32 = arith.constant 0 : i32
    %c0_i32_0 = arith.constant 0 : i32
    return %arg0, %c0_i32 : i32, i32
  }
}

</mosaic_0001>

<llo_original>
// kernel: tpu_custom_call.1
$region0: #{tpu_custom_call.1}
  #allocation0 [shape = 'u32[]', space=smem, size = 0x4, offset = 0x4, fixed_abs, tag = 'smem constant byte address 0x4 - core index']
  #allocation1 [shape = 'u32[144,128]{1,0:T(1,128)}', space=vmem, size = 0x12000, scoped, tag = 'internal scratch']
  %s0 = inlined_call_operand.hbm [shape: f32[16,32], index: 0, kind: input, shape index: {}]
  %s1 = inlined_call_operand.vmem [shape: f32[1,32], index: 1, kind: input, shape index: {}]
  %s2 = inlined_call_operand.vmem [shape: f32[1,32], index: 2, kind: input, shape index: {}]
  %s3 = inlined_call_operand.hbm [shape: bf16[16,32], index: 3, kind: output, shape index: {}]
  %s4 = sld [smem:[#allocation0]]
  $region49: #{tpu_custom_call.1} parent=0
    _
  %s6 = ssub.s32 1, %s4
  %s7 = scalar_select 0, %s6, %s4
  $region1: #{tpu_custom_call.1} parent=0
    #allocation2 [shape = 'u8[8192]{0}', space=vmem, size = 0x2000, scoped, tag = 'input window, operand 0']
    #allocation3 [shape = 's32[2]{0}', space=sflag, size = 0x8, scoped, tag = 'scoped memory for tpu_custom_call.1']
    #allocation4 [shape = 's32[2]{0}', space=sflag, size = 0x8, scoped, tag = 'scoped memory for tpu_custom_call.1']
    #allocation5 [shape = 'u8[4096]{0}', space=vmem, size = 0x1000, scoped, tag = 'output window, operand 0']
    %8 = vsyncpa [#allocation3], 0
    %s9 = scalar_lea.sflag [#allocation3], 1
    %10 = vsyncpa %s9, 0
    %11 = vsyncpa [#allocation4], 0
    %s12 = scalar_lea.sflag [#allocation4], 1
    %13 = vsyncpa %s12, 0
    loop: start=0, step=1, limit=4
    $region2: #{tpu_custom_call.1} parent=1 // loop_pre_header
      _
    $region3: #{tpu_custom_call.1} parent=1 // loop_header
      %s15 = sphi 0, %s19
      %p16 = scmp.ge.s32.totalorder %s15, 4
      %s25 = sphi 0, %s27
      %s28 = sphi 0, %s25
      %s29 = sphi 0, %s28
      %s45 = sphi 0, %s29
      %s49 = sphi 0, %s49
      %s51 = sphi 0, %s49
      %s52 = sphi 0, %s51
      %s66 = sphi 0, %s52
      %s70 = sphi 0, %s70
      %s72 = sphi 0, %s70
      %s73 = sphi 0, %s72
      %s87 = sphi 0, %s73
      %s93 = sphi 0, %s95
      %s96 = sphi 0, %s93
      %s97 = sphi 0, %s96
      %s113 = sphi 0, %s97
    $region4: #{tpu_custom_call.1} parent=1 // loop_header_branch
      %18 = sbr.rel (%p16) target = $region8
    $region5: #{tpu_custom_call.1} parent=1 // loop_body
      %s20 = ssub.s32 %s15, 1
      %s21 = ssub.s32 %s15, 2
      %s22 = sadd.s32 %s15, 1
      %s23 = ssub.s32 %s15, %s22
      %p24 = scmp.eq.s32.totalorder %s23, 0
      %s26 = sadd.s32 %s25, 1
      %s27 = scalar_select %p24, %s25, %s26
      %p30 = pneg %p24
      %p31 = scmp.eq.s32.totalorder %s15, 1
      %p32 = por %p30, %p31
      %p33 = scmp.ne.s32.totalorder %s25, %s28
      %p34 = scmp.eq.s32.totalorder %s15, 0
      %p35 = por %p33, %p34
      %p36 = scmp.ne.s32.totalorder %s25, %s28
      %p37 = scmp.eq.s32.totalorder %s20, 1
      %p38 = por %p36, %p37
      %p39 = scmp.ne.s32.totalorder %s28, %s29
      %p40 = scmp.eq.s32.totalorder %s20, 0
      %p41 = por %p39, %p40
      %p42 = scmp.ne.s32.totalorder %s28, %s29
      %p43 = scmp.eq.s32.totalorder %s21, 1
      %p44 = por %p42, %p43
      %p46 = scmp.ne.s32.totalorder %s29, %s45
      %p47 = scmp.eq.s32.totalorder %s21, 0
      %p48 = por %p46, %p47
      %s50 = sadd.s32 %s49, 1
      %p53 = scmp.eq.s32.totalorder %s15, 1
      %p54 = scmp.ne.s32.totalorder %s49, %s51
      %p55 = scmp.eq.s32.totalorder %s15, 0
      %p56 = por %p54, %p55
      %p57 = scmp.ne.s32.totalorder %s49, %s51
      %p58 = scmp.eq.s32.totalorder %s20, 1
      %p59 = por %p57, %p58
      %p60 = scmp.ne.s32.totalorder %s51, %s52
      %p61 = scmp.eq.s32.totalorder %s20, 0
      %p62 = por %p60, %p61
      %p63 = scmp.ne.s32.totalorder %s51, %s52
      %p64 = scmp.eq.s32.totalorder %s21, 1
      %p65 = por %p63, %p64
      %p67 = scmp.ne.s32.totalorder %s52, %s66
      %p68 = scmp.eq.s32.totalorder %s21, 0
      %p69 = por %p67, %p68
      %s71 = sadd.s32 %s70, 1
      %p74 = scmp.eq.s32.totalorder %s15, 1
      %p75 = scmp.ne.s32.totalorder %s70, %s72
      %p76 = scmp.eq.s32.totalorder %s15, 0
      %p77 = por %p75, %p76
      %p78 = scmp.ne.s32.totalorder %s70, %s72
      %p79 = scmp.eq.s32.totalorder %s20, 1
      %p80 = por %p78, %p79
      %p81 = scmp.ne.s32.totalorder %s72, %s73
      %p82 = scmp.eq.s32.totalorder %s20, 0
      %p83 = por %p81, %p82
      %p84 = scmp.ne.s32.totalorder %s72, %s73
      %p85 = scmp.eq.s32.totalorder %s21, 1
      %p86 = por %p84, %p85
      %p88 = scmp.ne.s32.totalorder %s73, %s87
      %p89 = scmp.eq.s32.totalorder %s21, 0
      %p90 = por %p88, %p89
      %s91 = ssub.s32 %s15, %s22
      %p92 = scmp.eq.s32.totalorder %s91, 0
      %s94 = sadd.s32 %s93, 1
      %s95 = scalar_select %p92, %s93, %s94
      %p98 = pneg %p92
      %p99 = scmp.eq.s32.totalorder %s15, 1
      %p100 = por %p98, %p99
      %p101 = scmp.ne.s32.totalorder %s93, %s96
      %p102 = scmp.eq.s32.totalorder %s15, 0
      %p103 = por %p101, %p102
      %p104 = scmp.ne.s32.totalorder %s93, %s96
      %p105 = scmp.eq.s32.totalorder %s20, 1
      %p106 = por %p104, %p105
      %p107 = scmp.ne.s32.totalorder %s96, %s97
      %p108 = scmp.eq.s32.totalorder %s20, 0
      %p109 = por %p107, %p108
      %p110 = scmp.ne.s32.totalorder %s96, %s97
      %p111 = scmp.eq.s32.totalorder %s21, 1
      %p112 = por %p110, %p111
      %p114 = scmp.ne.s32.totalorder %s97, %s113
      %p115 = scmp.eq.s32.totalorder %s21, 0
      %p116 = por %p114, %p115
      %p117 = scmp.le.s32.totalorder 1, %s15
      %p118 = scmp.lt.s32.totalorder %s15, 3
      %p119 = pnand %p117, %p118
      %p120 = pneg %p119
      // Predicated region
      $region9: #{tpu_custom_call.1} parent=5 // pred_check
        _
      $region10: #{tpu_custom_call.1} parent=5 // pred_check_branch
        %122 = sbr.rel (%p119) target = $region12
      $region11: #{tpu_custom_call.1} parent=5 // pred_region
        %s123 = ssub.s32 %s15, 1
        // Predicated region
        $region13: #{tpu_custom_call.1} parent=11 // pred_check
          %p124 = pneg %p62
        $region14: #{tpu_custom_call.1} parent=11 // pred_check_branch
          %126 = sbr.rel (%p124) target = $region16
        $region15: #{tpu_custom_call.1} parent=11 // pred_region
          _
        $region16: #{tpu_custom_call.1} parent=11 // pred_fallthru
          _
        // Predicated region
        $region17: #{tpu_custom_call.1} parent=11 // pred_check
          %p127 = pneg %p83
        $region18: #{tpu_custom_call.1} parent=11 // pred_check_branch
          %129 = sbr.rel (%p127) target = $region20
        $region19: #{tpu_custom_call.1} parent=11 // pred_region
          _
        $region20: #{tpu_custom_call.1} parent=11 // pred_fallthru
          _
      $region12: #{tpu_custom_call.1} parent=5 // pred_fallthru
        _
      %p130 = scmp.lt.s32.totalorder %s15, 2
      // Predicated region
      $region21: #{tpu_custom_call.1} parent=5 // pred_check
        %p131 = pneg %p130
      $region22: #{tpu_custom_call.1} parent=5 // pred_check_branch
        %133 = sbr.rel (%p131) target = $region24
      $region23: #{tpu_custom_call.1} parent=5 // pred_region
        // Predicated region
        $region25: #{tpu_custom_call.1} parent=23 // pred_check
          %p134 = pneg %p35
        $region26: #{tpu_custom_call.1} parent=23 // pred_check_branch
          %136 = sbr.rel (%p134) target = $region28
        $region27: #{tpu_custom_call.1} parent=23 // pred_region
          %s137 = sand.u32 %s25, 1
          %s138 = scalar_lea.sflag [#allocation3], %s137
          %s139 = sand.u32 %s25, 1
          %s140 = smul.addr %s139, 8
          %s141 = scalar_lea.vmem [#allocation2], %s140
          %s143 = ssub.s32 128, 128
          %144 = vsyncadd %s138, %s143
          %s145 = smul.addr %s15, 128
          %s146 = scalar_lea.hbm %s0, %s145
          %s148 = sshll.u32 %s141, 4
          %s149 = int_to_ptr.vmem [resolvable:$true] %s148
          %151 = dma.hbm_to_vmem [thread:$0]  %s146, 128, %s149, %s138
        $region28: #{tpu_custom_call.1} parent=23 // pred_fallthru
          _
      $region24: #{tpu_custom_call.1} parent=5 // pred_fallthru
        _
      %p152 = scmp.le.s32.totalorder 1, %s15
      %p153 = scmp.lt.s32.totalorder %s15, 3
      %p154 = pnand %p152, %p153
      %p155 = pneg %p154
      // Predicated region
      $region29: #{tpu_custom_call.1} parent=5 // pred_check
        _
      $region30: #{tpu_custom_call.1} parent=5 // pred_check_branch
        %157 = sbr.rel (%p154) target = $region32
      $region31: #{tpu_custom_call.1} parent=5 // pred_region
        %s158 = ssub.s32 %s15, 1
        %s159 = sand.u32 %s28, 1
        %s160 = scalar_lea.sflag [#allocation3], %s159
        %s161 = sand.u32 %s28, 1
        %s162 = smul.addr %s161, 8
        %s163 = scalar_lea.vmem [#allocation2], %s162
        // Predicated region
        $region33: #{tpu_custom_call.1} parent=31 // pred_check
          %p164 = pneg %p41
        $region34: #{tpu_custom_call.1} parent=31 // pred_check_branch
          %166 = sbr.rel (%p164) target = $region36
        $region35: #{tpu_custom_call.1} parent=31 // pred_region
          %167 = dma.done %s160, 128
        $region36: #{tpu_custom_call.1} parent=31 // pred_fallthru
          _
        %s168 = sand.u32 %s28, 1
        %s169 = scalar_lea.sflag [#allocation3], %s168
        %s170 = sand.u32 %s28, 1
        %s171 = smul.addr %s170, 8
        %s172 = scalar_lea.vmem [#allocation2], %s171
        %p173 = pneg %p41
        %p174 = pneg %p38
        %p175 = pneg %p62
        %p176 = pneg %p59
        %p177 = pneg %p83
        %p178 = pneg %p80
        %p179 = pneg %p109
        %p180 = pneg %p106
        %s181 = sand.u32 %s96, 1
        %s182 = scalar_lea.sflag [#allocation4], %s181
        %s183 = sand.u32 %s96, 1
        %s184 = smul.addr %s183, 4
        %s185 = scalar_lea.vmem [#allocation5], %s184
        %v186 = vld [vmem:[%s163] sm:$0xff]
        %vm187 = vcmask 261120
        %v188 = vsel %vm187, %v186, 0.0
        %189 = vadd.xlane.f32.xlu0 %v188
        %v190 = vpop.xlane.xlu0 %189
        %v191 = vrcp.pop 32.0
        %v192 = vmul.f32 %v190, %v191
        %v193 = vsub.f32 %v186, %v192
        %v194 = vmul.f32 %v193, %v193
        %v195 = vsel %vm187, %v194, 0.0
        %196 = vadd.xlane.f32.xlu0 %v195
        %v197 = vpop.xlane.xlu0 %196
        %v198 = vmul.f32 %v197, %v191
        %v199 = vadd.f32 %v198, 1e-12
        %v200 = vrsqrt.pop %v199
        %v201 = vmul.f32 %v193, %v200
        %v202 = vld [vmem:[%s1] sm:$0x1]
        %v204 = vlaneseq
        %v205 = vshrl.u32 %v204, 7
        %v206 = vsub.s32 0, %v205
        %v207 = vrot.slane %v202, %v206
        %v209 = vmul.f32 %v201, %v207
        %v210 = vld [vmem:[%s2] sm:$0x1]
        %v212 = vlaneseq
        %v213 = vshrl.u32 %v212, 7
        %v214 = vsub.s32 0, %v213
        %v215 = vrot.slane %v210, %v214
        %v217 = vadd.f32 %v209, %v215
        %v218 = vpack.c.bf16 %v217, %v217
        %vm219 = vcmask 257024
        %220 = vst.msk [vmem:[%s185] sm:$0xf] %vm219, %v218
        %s221 = sand.u32 %s96, 1
        %s222 = scalar_lea.sflag [#allocation4], %s221
        %s223 = sand.u32 %s96, 1
        %s224 = smul.addr %s223, 4
        %s225 = scalar_lea.vmem [#allocation5], %s224
        // Predicated region
        $region37: #{tpu_custom_call.1} parent=31 // pred_check
          %p226 = pneg %p106
        $region38: #{tpu_custom_call.1} parent=31 // pred_check_branch
          %228 = sbr.rel (%p226) target = $region40
        $region39: #{tpu_custom_call.1} parent=31 // pred_region
          %s230 = ssub.s32 64, 64
          %231 = vsyncadd %s222, %s230
          %s232 = smul.addr %s20, 64
          %s233 = scalar_lea.hbm %s3, %s232
          %s235 = sshll.u32 %s225, 4
          %s236 = int_to_ptr.vmem [resolvable:$true] %s235
          %238 = dma.vmem_to_hbm [thread:$0]  %s236, 64, %s233, %s222
        $region40: #{tpu_custom_call.1} parent=31 // pred_fallthru
          _
      $region32: #{tpu_custom_call.1} parent=5 // pred_fallthru
        _
      %p239 = scmp.le.s32.totalorder 2, %s15
      // Predicated region
      $region41: #{tpu_custom_call.1} parent=5 // pred_check
        %p240 = pneg %p239
      $region42: #{tpu_custom_call.1} parent=5 // pred_check_branch
        %242 = sbr.rel (%p240) target = $region44
      $region43: #{tpu_custom_call.1} parent=5 // pred_region
        %s243 = ssub.s32 %s15, 2
        // Predicated region
        $region45: #{tpu_custom_call.1} parent=43 // pred_check
          %p244 = pneg %p112
        $region46: #{tpu_custom_call.1} parent=43 // pred_check_branch
          %246 = sbr.rel (%p244) target = $region48
        $region47: #{tpu_custom_call.1} parent=43 // pred_region
          %s247 = sand.u32 %s97, 1
          %s248 = scalar_lea.sflag [#allocation4], %s247
          %s249 = sand.u32 %s97, 1
          %s250 = smul.addr %s249, 4
          %s251 = scalar_lea.vmem [#allocation5], %s250
          %252 = dma.done %s248, 64
        $region48: #{tpu_custom_call.1} parent=43 // pred_fallthru
          _
      $region44: #{tpu_custom_call.1} parent=5 // pred_fallthru
        _
    $region6: #{tpu_custom_call.1} parent=1 // loop_footer
      %s19 = sadd.s32 1, %s15
    $region7: #{tpu_custom_call.1} parent=1 // loop_footer_branch
      %14 = sbr.rel target = $region3
    $region8: #{tpu_custom_call.1} parent=1 // loop_exit
      _
    %253 = vsyncpa [#allocation3], 1
    %s254 = scalar_lea.sflag [#allocation3], 1
    %255 = vsyncpa %s254, 1
    %256 = vsyncpa [#allocation4], 1
    %s257 = scalar_lea.sflag [#allocation4], 1
    %258 = vsyncpa %s257, 1

</llo_original>
